<compile_context>
chip_gen: v7x
topology: tpu7x:2x2x1
jax: 0.10.0
libtpu: 0.0.40
codegen_flags: <defaults>
</compile_context>

<pallas_src>
import jax
import jax.numpy as jnp
from jax.experimental import pallas as pl
from jax.experimental.pallas import tpu as pltpu


def _round_up(n, m):
    return (n + m - 1) // m * m


def mlp_kernel(x_ref, w1_ref, b1_ref, w2_ref, b2_ref, w3_ref, b3_ref, o_ref):
    # x tile streams in its HBM dtype; cast in-register to the compute dtype.
    x = x_ref[...].astype(w1_ref.dtype)
    h1 = jnp.dot(x, w1_ref[...], preferred_element_type=jnp.float32) + b1_ref[...]
    h1 = jnp.maximum(h1, 0.0).astype(w2_ref.dtype)
    h2 = jnp.dot(h1, w2_ref[...], preferred_element_type=jnp.float32) + b2_ref[...]
    h2 = jnp.maximum(h2, 0.0).astype(w3_ref.dtype)
    # Final layer computed directly in transposed layout on the MXU:
    #   out_t[n, m] = sum_k w3[k, n] * h2[m, k]   -> (out_sub, tile_b)
    # Batch lands on the lane axis, so the store is lane-dense with only
    # 16 sublanes of writeback instead of a 128-lane padded row per sample.
    out_t = jax.lax.dot_general(
        w3_ref[...], h2, (((0,), (1,)), ((), ())),
        preferred_element_type=jnp.float32,
    ) + b3_ref[...]
    o_ref[...] = out_t.astype(o_ref.dtype)


def prepare_params(params, compute_dtype=jnp.float32):
    """One-time weight prep (pad + cast). Call once at init, reuse every forward.

    Weights are (in_features, out_features) == PyTorch weight.T. Hidden dims are
    zero-padded to multiples of 128 (exact: bias 0 -> relu(0)=0 -> no downstream
    contribution); the output dim is padded only to 16 sublanes. Weights are cast
    to compute_dtype (bf16 recommended on v6e/v7x); biases stay f32.
    """
    w1, b1 = params["w1"], params["b1"]
    w2, b2 = params["w2"], params["b2"]
    w3, b3 = params["w3"], params["b3"]
    hidden = w1.shape[1]
    out_dim = w3.shape[1]
    hid_p = _round_up(hidden, 128)
    out_sub = _round_up(out_dim, 16)  # sublane-only padding (covers bf16 packing)
    return {
        "w1": jnp.pad(w1, ((0, 0), (0, hid_p - hidden))).astype(compute_dtype),
        "b1": jnp.pad(b1, ((0, 0), (0, hid_p - hidden))).astype(jnp.float32),
        "w2": jnp.pad(w2, ((0, hid_p - hidden), (0, hid_p - hidden))).astype(compute_dtype),
        "b2": jnp.pad(b2, ((0, 0), (0, hid_p - hidden))).astype(jnp.float32),
        "w3": jnp.pad(w3, ((0, hid_p - hidden), (0, out_sub - out_dim))).astype(compute_dtype),
        "b3_t": jnp.pad(b3, ((0, 0), (0, out_sub - out_dim))).T.astype(jnp.float32),  # (out_sub, 1)
        "out_dim": out_dim,
    }


def simple_model_forward(x, prepped, *, tile_b=None):
    """x: (B, input_dim). prepped: output of prepare_params(). Returns (B, out_dim)
    in the compute dtype (f32 path is exact w.r.t. the PyTorch module)."""
    B, in_dim = x.shape
    w1, b1 = prepped["w1"], prepped["b1"]
    w2, b2 = prepped["w2"], prepped["b2"]
    w3, b3t = prepped["w3"], prepped["b3_t"]
    out_dim = prepped["out_dim"]
    out_sub = w3.shape[1]
    compute_dtype = w1.dtype

    # --- batch tiling (tunable) ---
    # Large tiles amortize the ~0.35 us/step pipeline overhead; the 2048 cap keeps
    # per-step VMEM ~2.5 MB f32 (double-buffered x + out + resident weights), under
    # v5e's 16 MiB scoped default, and leaves >=2 grid steps once B >= 256 so the
    # "parallel" batch axis can be split across v7x's two TensorCores.
    if tile_b is None:
        tile_b = min(2048, max(128, _round_up((B + 1) // 2, 128)))
    if tile_b >= B:
        tile_b = B  # single block covering the whole batch (any B is legal)
    else:
        assert tile_b % 128 == 0, (
            "tile_b must be a multiple of 128 when it does not cover the full "
            "batch (batch sits on the lane axis of the transposed output)")

    grid = (pl.cdiv(B, tile_b),)  # ragged last tile handled by bounds masking
    # Weights/biases: constant block index across the grid -> stay VMEM resident.
    full = lambda a: pl.BlockSpec(a.shape, lambda i: (0,) * a.ndim)

    out_t = pl.pallas_call(
        mlp_kernel,
        out_shape=jax.ShapeDtypeStruct((out_sub, B), compute_dtype),
        grid_spec=pltpu.PrefetchScalarGridSpec(
            num_scalar_prefetch=0,
            grid=grid,
            in_specs=[
                pl.BlockSpec((tile_b, in_dim), lambda i: (i, 0)),  # x tile (streams)
                full(w1), full(b1),
                full(w2), full(b2),
                full(w3), full(b3t),
            ],
            out_specs=pl.BlockSpec((out_sub, tile_b), lambda i: (0, i)),
        ),
        compiler_params=pltpu.CompilerParams(
            dimension_semantics=("parallel",),
        ),
    )(x, w1, b1, w2, b2, w3, b3t)

    # Tiny (out_sub, B) slab -> (B, out_dim); negligible HBM traffic.
    return out_t[:out_dim, :].T


def init_params(key, input_dim=128, hidden_dim=64, output_dim=10):
    """Deterministic init mimicking nn.Linear's uniform(-1/sqrt(fan_in), 1/sqrt(fan_in)).
    Weights stored as (in_features, out_features) == PyTorch weight.T."""
    ks = jax.random.split(key, 6)

    def linear(kw, kb, fan_in, fan_out):
        bound = 1.0 / jnp.sqrt(fan_in)
        w = jax.random.uniform(kw, (fan_in, fan_out), jnp.float32, -bound, bound)
        b = jax.random.uniform(kb, (1, fan_out), jnp.float32, -bound, bound)
        return w, b

    w1, b1 = linear(ks[0], ks[1], input_dim, hidden_dim)
    w2, b2 = linear(ks[2], ks[3], hidden_dim, hidden_dim)
    w3, b3 = linear(ks[4], ks[5], hidden_dim, output_dim)
    return {"w1": w1, "b1": b1, "w2": w2, "b2": b2, "w3": w3, "b3": b3}


if __name__ == "__main__":
    key = jax.random.PRNGKey(0)
    k_x, k_p = jax.random.split(key)

    B, input_dim, hidden_dim, output_dim = 8, 128, 64, 10
    x = jax.random.normal(k_x, (B, input_dim), jnp.float32)
    params = init_params(k_p, input_dim, hidden_dim, output_dim)

    # Pure-JAX reference (same math as the PyTorch module).
    ref = jnp.maximum(x @ params["w1"] + params["b1"], 0.0)
    ref = jnp.maximum(ref @ params["w2"] + params["b2"], 0.0)
    ref = ref @ params["w3"] + params["b3"]

    # f32 path: exact semantics of the PyTorch module.
    prepped_f32 = prepare_params(params, compute_dtype=jnp.float32)
    out_f32 = jax.block_until_ready(simple_model_forward(x, prepped_f32))
    assert out_f32.shape == (B, output_dim)
    assert jnp.allclose(out_f32, ref, atol=1e-5, rtol=1e-5)

    # bf16 operand + output path (recommended on v6e/v7x): f32 accumulation, looser tol.
    prepped_bf16 = prepare_params(params, compute_dtype=jnp.bfloat16)
    out_bf16 = jax.block_until_ready(simple_model_forward(x, prepped_bf16))
    assert out_bf16.shape == (B, output_dim)
    assert jnp.allclose(out_bf16.astype(jnp.float32), ref, atol=5e-2, rtol=5e-2)

    # Larger batch exercising a multi-step grid with a ragged final tile.
    B2 = 300
    x2 = jax.random.normal(k_x, (B2, input_dim), jnp.float32)
    ref2 = jnp.maximum(x2 @ params["w1"] + params["b1"], 0.0)
    ref2 = jnp.maximum(ref2 @ params["w2"] + params["b2"], 0.0)
    ref2 = ref2 @ params["w3"] + params["b3"]
    out2 = jax.block_until_ready(simple_model_forward(x2, prepped_f32, tile_b=128))
    assert out2.shape == (B2, output_dim)
    assert jnp.allclose(out2, ref2, atol=1e-5, rtol=1e-5)

    print("KERNEL_OK")
</pallas_src>

<mosaic_0001>
module attributes {stable_mosaic.version = 11 : i64} {
  func.func @mlp_kernel(%arg0: i32, %arg1: memref<8x128xf32, #tpu.memory_space<vmem>>, %arg2: memref<128x128xf32, #tpu.memory_space<vmem>>, %arg3: memref<1x128xf32, #tpu.memory_space<vmem>>, %arg4: memref<128x128xf32, #tpu.memory_space<vmem>>, %arg5: memref<1x128xf32, #tpu.memory_space<vmem>>, %arg6: memref<128x16xf32, #tpu.memory_space<vmem>>, %arg7: memref<16x1xf32, #tpu.memory_space<vmem>>, %arg8: memref<16x8xf32, #tpu.memory_space<vmem>>) attributes {dimension_semantics = [#tpu.dimension_semantics<parallel>], iteration_bounds = array<i64: 1>, scalar_prefetch = 0 : i64, scratch_operands = 0 : i64, tpu.core_type = #tpu.core_type<tc>, window_params = [{transform_indices = @transform_0, window_bounds = array<i64: 8, 128>}, {pipeline_mode = #tpu.pipeline_mode<synchronous>, transform_indices = @transform_1, window_bounds = array<i64: 128, 128>}, {pipeline_mode = #tpu.pipeline_mode<synchronous>, transform_indices = @transform_2, window_bounds = array<i64: 1, 128>}, {pipeline_mode = #tpu.pipeline_mode<synchronous>, transform_indices = @transform_3, window_bounds = array<i64: 128, 128>}, {pipeline_mode = #tpu.pipeline_mode<synchronous>, transform_indices = @transform_4, window_bounds = array<i64: 1, 128>}, {pipeline_mode = #tpu.pipeline_mode<synchronous>, transform_indices = @transform_5, window_bounds = array<i64: 128, 16>}, {pipeline_mode = #tpu.pipeline_mode<synchronous>, transform_indices = @transform_6, window_bounds = array<i64: 16, 1>}, {transform_indices = @transform_7, window_bounds = array<i64: 16, 8>}]} {
    %c0 = arith.constant 0 : index
    %c0_0 = arith.constant 0 : index
    %0 = vector.load %arg1[%c0, %c0_0] : memref<8x128xf32, #tpu.memory_space<vmem>>, vector<8x128xf32>
    %c0_1 = arith.constant 0 : index
    %c0_2 = arith.constant 0 : index
    %1 = vector.load %arg2[%c0_1, %c0_2] : memref<128x128xf32, #tpu.memory_space<vmem>>, vector<128x128xf32>
    %cst = arith.constant dense<0.000000e+00> : vector<8x128xf32>
    %2 = tpu.matmul %0, %1, %cst {dimension_numbers = #tpu.dot_dimension_numbers<[1], [0], [0], [1], [0, 0, 1, 1], [], []>} : vector<8x128xf32>, vector<128x128xf32>, vector<8x128xf32> -> vector<8x128xf32>
    %c0_3 = arith.constant 0 : index
    %c0_4 = arith.constant 0 : index
    %3 = vector.load %arg3[%c0_3, %c0_4] : memref<1x128xf32, #tpu.memory_space<vmem>>, vector<1x128xf32>
    %4 = vector.broadcast %3 : vector<1x128xf32> to vector<8x128xf32>
    %5 = arith.addf %2, %4 : vector<8x128xf32>
    %cst_5 = arith.constant 0.000000e+00 : f32
    %6 = vector.broadcast %cst_5 : f32 to vector<8x128xf32>
    %7 = arith.maximumf %5, %6 : vector<8x128xf32>
    %c0_6 = arith.constant 0 : index
    %c0_7 = arith.constant 0 : index
    %8 = vector.load %arg4[%c0_6, %c0_7] : memref<128x128xf32, #tpu.memory_space<vmem>>, vector<128x128xf32>
    %cst_8 = arith.constant dense<0.000000e+00> : vector<8x128xf32>
    %9 = tpu.matmul %7, %8, %cst_8 {dimension_numbers = #tpu.dot_dimension_numbers<[1], [0], [0], [1], [0, 0, 1, 1], [], []>} : vector<8x128xf32>, vector<128x128xf32>, vector<8x128xf32> -> vector<8x128xf32>
    %c0_9 = arith.constant 0 : index
    %c0_10 = arith.constant 0 : index
    %10 = vector.load %arg5[%c0_9, %c0_10] : memref<1x128xf32, #tpu.memory_space<vmem>>, vector<1x128xf32>
    %11 = vector.broadcast %10 : vector<1x128xf32> to vector<8x128xf32>
    %12 = arith.addf %9, %11 : vector<8x128xf32>
    %cst_11 = arith.constant 0.000000e+00 : f32
    %13 = vector.broadcast %cst_11 : f32 to vector<8x128xf32>
    %14 = arith.maximumf %12, %13 : vector<8x128xf32>
    %c0_12 = arith.constant 0 : index
    %c0_13 = arith.constant 0 : index
    %15 = vector.load %arg6[%c0_12, %c0_13] : memref<128x16xf32, #tpu.memory_space<vmem>>, vector<128x16xf32>
    %cst_14 = arith.constant dense<0.000000e+00> : vector<16x8xf32>
    %16 = tpu.matmul %15, %14, %cst_14 {dimension_numbers = #tpu.dot_dimension_numbers<[0], [1], [1], [0], [0, 1, 1, 0], [], []>} : vector<128x16xf32>, vector<8x128xf32>, vector<16x8xf32> -> vector<16x8xf32>
    %c0_15 = arith.constant 0 : index
    %c0_16 = arith.constant 0 : index
    %17 = vector.load %arg7[%c0_15, %c0_16] : memref<16x1xf32, #tpu.memory_space<vmem>>, vector<16x1xf32>
    %18 = vector.broadcast %17 : vector<16x1xf32> to vector<16x8xf32>
    %19 = arith.addf %16, %18 : vector<16x8xf32>
    %c0_17 = arith.constant 0 : index
    %c0_18 = arith.constant 0 : index
    %20 = vector.load %arg8[%c0_17, %c0_18] : memref<16x8xf32, #tpu.memory_space<vmem>>, vector<16x8xf32>
    tpu.vector_store %arg8[%c0_17, %c0_18], %19 {strides = array<i32>} : memref<16x8xf32, #tpu.memory_space<vmem>>, vector<16x8xf32>,
    return
  }
  func.func @transform_0(%arg0: i32) -> (i32, i32) {
    %c0_i32 = arith.constant 0 : i32
    %c0_i32_0 = arith.constant 0 : i32
    return %arg0, %c0_i32 : i32, i32
  }
  func.func @transform_1(%arg0: i32) -> (i32, i32) {
    %c0_i32 = arith.constant 0 : i32
    %c0_i32_0 = arith.constant 0 : i32
    %c0_i32_1 = arith.constant 0 : i32
    return %c0_i32, %c0_i32_0 : i32, i32
  }
  func.func @transform_2(%arg0: i32) -> (i32, i32) {
    %c0_i32 = arith.constant 0 : i32
    %c0_i32_0 = arith.constant 0 : i32
    %c0_i32_1 = arith.constant 0 : i32
    return %c0_i32, %c0_i32_0 : i32, i32
  }
  func.func @transform_3(%arg0: i32) -> (i32, i32) {
    %c0_i32 = arith.constant 0 : i32
    %c0_i32_0 = arith.constant 0 : i32
    %c0_i32_1 = arith.constant 0 : i32
    return %c0_i32, %c0_i32_0 : i32, i32
  }
  func.func @transform_4(%arg0: i32) -> (i32, i32) {
    %c0_i32 = arith.constant 0 : i32
    %c0_i32_0 = arith.constant 0 : i32
    %c0_i32_1 = arith.constant 0 : i32
    return %c0_i32, %c0_i32_0 : i32, i32
  }
  func.func @transform_5(%arg0: i32) -> (i32, i32) {
    %c0_i32 = arith.constant 0 : i32
    %c0_i32_0 = arith.constant 0 : i32
    %c0_i32_1 = arith.constant 0 : i32
    return %c0_i32, %c0_i32_0 : i32, i32
  }
  func.func @transform_6(%arg0: i32) -> (i32, i32) {
    %c0_i32 = arith.constant 0 : i32
    %c0_i32_0 = arith.constant 0 : i32
    %c0_i32_1 = arith.constant 0 : i32
    return %c0_i32, %c0_i32_0 : i32, i32
  }
  func.func @transform_7(%arg0: i32) -> (i32, i32) {
    %c0_i32 = arith.constant 0 : i32
    %c0_i32_0 = arith.constant 0 : i32
    return %c0_i32, %arg0 : i32, i32
  }
}

</mosaic_0001>

<llo_original>
// kernel: tpu_custom_call.1
$region0: #{tpu_custom_call.1}
  #allocation0 [shape = 'u32[]', space=smem, size = 0x4, offset = 0x4, fixed_abs, tag = 'smem constant byte address 0x4 - core index']
  #allocation1 [shape = 'u32[144,128]{1,0:T(1,128)}', space=vmem, size = 0x12000, scoped, tag = 'internal scratch']
  %s0 = inlined_call_operand.vmem [shape: f32[8,128], index: 0, kind: input, shape index: {}]
  %s1 = inlined_call_operand.vmem [shape: f32[128,128], index: 1, kind: input, shape index: {}]
  %s2 = inlined_call_operand.vmem [shape: f32[1,128], index: 2, kind: input, shape index: {}]
  %s3 = inlined_call_operand.hbm [shape: f32[128,128], index: 3, kind: input, shape index: {}]
  %s4 = inlined_call_operand.vmem [shape: f32[1,128], index: 4, kind: input, shape index: {}]
  %s5 = inlined_call_operand.vmem [shape: f32[128,16], index: 5, kind: input, shape index: {}]
  %s6 = inlined_call_operand.vmem [shape: f32[16,1], index: 6, kind: input, shape index: {}]
  %s7 = inlined_call_operand.vmem [shape: f32[16,8], index: 7, kind: output, shape index: {}]
  %s8 = sld [smem:[#allocation0]]
  $region42: #{tpu_custom_call.1} parent=0
    _
  %s10 = ssub.s32 1, %s8
  %s11 = scalar_select 0, %s10, %s8
  $region1: #{tpu_custom_call.1} parent=0
    #allocation2 [shape = 'u8[65536]{0}', space=vmem, size = 0x10000, scoped, tag = 'input window, operand 3, single buffered']
    #allocation3 [shape = 's32[1]{0}', space=sflag, size = 0x4, scoped, tag = 'scoped memory for tpu_custom_call.1']
    %12 = vsyncpa [#allocation3], 0
    // Predicated region
    $region2: #{tpu_custom_call.1} parent=1 // pred_check
      _
    $region3: #{tpu_custom_call.1} parent=1 // pred_check_branch
      %14 = sbr.rel (0) target = $region5
    $region4: #{tpu_custom_call.1} parent=1 // pred_region
      _
    $region5: #{tpu_custom_call.1} parent=1 // pred_fallthru
      _
    // Predicated region
    $region6: #{tpu_custom_call.1} parent=1 // pred_check
      _
    $region7: #{tpu_custom_call.1} parent=1 // pred_check_branch
      %16 = sbr.rel (0) target = $region9
    $region8: #{tpu_custom_call.1} parent=1 // pred_region
      _
    $region9: #{tpu_custom_call.1} parent=1 // pred_fallthru
      _
    // Predicated region
    $region10: #{tpu_custom_call.1} parent=1 // pred_check
      _
    $region11: #{tpu_custom_call.1} parent=1 // pred_check_branch
      %18 = sbr.rel (0) target = $region13
    $region12: #{tpu_custom_call.1} parent=1 // pred_region
      _
    $region13: #{tpu_custom_call.1} parent=1 // pred_fallthru
      _
    // Predicated region
    $region14: #{tpu_custom_call.1} parent=1 // pred_check
      _
    $region15: #{tpu_custom_call.1} parent=1 // pred_check_branch
      %20 = sbr.rel (0) target = $region17
    $region16: #{tpu_custom_call.1} parent=1 // pred_region
      %s22 = ssub.s32 2048, 2048
      %23 = vsyncadd [#allocation3], %s22
      %s24 = sshll.u32 [#allocation2], 4
      %s25 = int_to_ptr.vmem [resolvable:$true] %s24
      %30 = dma.hbm_to_vmem [thread:$0]  %s3, 2048, %s25, [#allocation3], 128, 128, 8
    $region17: #{tpu_custom_call.1} parent=1 // pred_fallthru
      _
    // Predicated region
    $region18: #{tpu_custom_call.1} parent=1 // pred_check
      _
    $region19: #{tpu_custom_call.1} parent=1 // pred_check_branch
      %32 = sbr.rel (0) target = $region21
    $region20: #{tpu_custom_call.1} parent=1 // pred_region
      _
    $region21: #{tpu_custom_call.1} parent=1 // pred_fallthru
      _
    // Predicated region
    $region22: #{tpu_custom_call.1} parent=1 // pred_check
      _
    $region23: #{tpu_custom_call.1} parent=1 // pred_check_branch
      %34 = sbr.rel (0) target = $region25
    $region24: #{tpu_custom_call.1} parent=1 // pred_region
      _
    $region25: #{tpu_custom_call.1} parent=1 // pred_fallthru
      _
    // Predicated region
    $region26: #{tpu_custom_call.1} parent=1 // pred_check
      _
    $region27: #{tpu_custom_call.1} parent=1 // pred_check_branch
      %36 = sbr.rel (0) target = $region29
    $region28: #{tpu_custom_call.1} parent=1 // pred_region
      _
    $region29: #{tpu_custom_call.1} parent=1 // pred_fallthru
      _
    // Predicated region
    $region30: #{tpu_custom_call.1} parent=1 // pred_check
      _
    $region31: #{tpu_custom_call.1} parent=1 // pred_check_branch
      %38 = sbr.rel (0) target = $region33
    $region32: #{tpu_custom_call.1} parent=1 // pred_region
      %39 = dma.done [#allocation3], 2048
    $region33: #{tpu_custom_call.1} parent=1 // pred_fallthru
      _
    %v40 = vld [vmem:[%s0] sm:$0xff]
    %v41 = vld [vmem:[%s1] sm:$0xff]
    %v42 = vld [vmem:[%s1 + $0x8] sm:$0xff]
    %v43 = vld [vmem:[%s1 + $0x10] sm:$0xff]
    %v44 = vld [vmem:[%s1 + $0x18] sm:$0xff]
    %v45 = vld [vmem:[%s1 + $0x20] sm:$0xff]
    %v46 = vld [vmem:[%s1 + $0x28] sm:$0xff]
    %v47 = vld [vmem:[%s1 + $0x30] sm:$0xff]
    %v48 = vld [vmem:[%s1 + $0x38] sm:$0xff]
    %v49 = vld [vmem:[%s1 + $0x40] sm:$0xff]
    %v50 = vld [vmem:[%s1 + $0x48] sm:$0xff]
    %v51 = vld [vmem:[%s1 + $0x50] sm:$0xff]
    %v52 = vld [vmem:[%s1 + $0x58] sm:$0xff]
    %v53 = vld [vmem:[%s1 + $0x60] sm:$0xff]
    %v54 = vld [vmem:[%s1 + $0x68] sm:$0xff]
    %v55 = vld [vmem:[%s1 + $0x70] sm:$0xff]
    %v56 = vld [vmem:[%s1 + $0x78] sm:$0xff]
    %v57 = vld [vmem:[%s2] sm:$0x1]
    %v59 = vlaneseq
    %v60 = vshrl.u32 %v59, 7
    %v61 = vsub.s32 0, %v60
    %v62 = vrot.slane %v57, %v61
    %64 = vmatprep.subr.mxu0 0.0
    %65 = vmatpush1.msra.mxu0 %v41
    %66 = vmatprep.subr.mxu0 0.0
    %67 = vmatpush1.msra.mxu0 %v42
    %68 = vmatprep.subr.mxu0 0.0
    %69 = vmatpush1.msra.mxu0 %v43
    %70 = vmatprep.subr.mxu0 0.0
    %71 = vmatpush1.msra.mxu0 %v44
    %72 = vmatprep.subr.mxu0 0.0
    %73 = vmatpush1.msra.mxu0 %v45
    %74 = vmatprep.subr.mxu0 0.0
    %75 = vmatpush1.msra.mxu0 %v46
    %76 = vmatprep.subr.mxu0 0.0
    %77 = vmatpush1.msra.mxu0 %v47
    %78 = vmatprep.subr.mxu0 0.0
    %79 = vmatpush1.msra.mxu0 %v48
    %80 = vmatprep.subr.mxu0 0.0
    %81 = vmatpush1.msra.mxu0 %v49
    %82 = vmatprep.subr.mxu0 0.0
    %83 = vmatpush1.msra.mxu0 %v50
    %84 = vmatprep.subr.mxu0 0.0
    %85 = vmatpush1.msra.mxu0 %v51
    %86 = vmatprep.subr.mxu0 0.0
    %87 = vmatpush1.msra.mxu0 %v52
    %88 = vmatprep.subr.mxu0 0.0
    %89 = vmatpush1.msra.mxu0 %v53
    %90 = vmatprep.subr.mxu0 0.0
    %91 = vmatpush1.msra.mxu0 %v54
    %92 = vmatprep.subr.mxu0 0.0
    %93 = vmatpush1.msra.mxu0 %v55
    %94 = vmatprep.subr.mxu0 0.0
    %95 = vmatpush1.msra.mxu0 %v56
    %96 = vmatprep.subr.mxu0 0.0
    %97 = vmatpush1.msra.mxu0 0.0
    %98 = vmatprep.subr.mxu0 0.0
    %99 = vmatpush1.msra.mxu0 0.0
    %100 = vmatprep.subr.mxu0 0.0
    %101 = vmatpush1.msra.mxu0 0.0
    %102 = vmatprep.subr.mxu0 0.0
    %103 = vmatpush1.msra.mxu0 0.0
    %104 = vmatprep.subr.mxu0 0.0
    %105 = vmatpush1.msra.mxu0 0.0
    %106 = vmatprep.subr.mxu0 0.0
    %107 = vmatpush1.msra.mxu0 0.0
    %108 = vmatprep.subr.mxu0 0.0
    %109 = vmatpush1.msra.mxu0 0.0
    %110 = vmatprep.subr.mxu0 0.0
    %111 = vmatpush1.msra.mxu0 0.0
    %112 = vmatprep.subr.mxu0 0.0
    %113 = vmatpush1.msra.mxu0 0.0
    %114 = vmatprep.subr.mxu0 0.0
    %115 = vmatpush1.msra.mxu0 0.0
    %116 = vmatprep.subr.mxu0 0.0
    %117 = vmatpush1.msra.mxu0 0.0
    %118 = vmatprep.subr.mxu0 0.0
    %119 = vmatpush1.msra.mxu0 0.0
    %120 = vmatprep.subr.mxu0 0.0
    %121 = vmatpush1.msra.mxu0 0.0
    %122 = vmatprep.subr.mxu0 0.0
    %123 = vmatpush1.msra.mxu0 0.0
    %124 = vmatprep.subr.mxu0 0.0
    %125 = vmatpush1.msra.mxu0 0.0
    %126 = vmatprep.subr.mxu0 0.0
    %127 = vmatpush1.msra.mxu0 0.0
    %128 = vmatprep.mubr.f32.mxu0 0.0
    %129 = vmatmul.mubr.f32.gmra.mrb[0].mxu0 %v40
    %v130 = vpop.f32.mrb[0].mxu0
    %v131 = vadd.f32 %v62, %v130
    %v132 = vpop.f32.mrb[0].mxu0
    %133 = vdwg.mxu0
    %v134 = vmax.f32 %v131, 0.0
    %v135 = vld [vmem:[#allocation2] sm:$0xff]
    %v136 = vld [vmem:[#allocation2 + $0x8] sm:$0xff]
    %v137 = vld [vmem:[#allocation2 + $0x10] sm:$0xff]
    %v138 = vld [vmem:[#allocation2 + $0x18] sm:$0xff]
    %v139 = vld [vmem:[#allocation2 + $0x20] sm:$0xff]
    %v140 = vld [vmem:[#allocation2 + $0x28] sm:$0xff]
    %v141 = vld [vmem:[#allocation2 + $0x30] sm:$0xff]
    %v142 = vld [vmem:[#allocation2 + $0x38] sm:$0xff]
    %v143 = vld [vmem:[#allocation2 + $0x40] sm:$0xff]
    %v144 = vld [vmem:[#allocation2 + $0x48] sm:$0xff]
    %v145 = vld [vmem:[#allocation2 + $0x50] sm:$0xff]
    %v146 = vld [vmem:[#allocation2 + $0x58] sm:$0xff]
    %v147 = vld [vmem:[#allocation2 + $0x60] sm:$0xff]
    %v148 = vld [vmem:[#allocation2 + $0x68] sm:$0xff]
    %v149 = vld [vmem:[#allocation2 + $0x70] sm:$0xff]
    %v150 = vld [vmem:[#allocation2 + $0x78] sm:$0xff]
    %v151 = vld [vmem:[%s4] sm:$0x1]
    %v153 = vlaneseq
    %v154 = vshrl.u32 %v153, 7
    %v155 = vsub.s32 0, %v154
    %v156 = vrot.slane %v151, %v155
    %158 = vmatprep.subr.mxu0 0.0
    %159 = vmatpush1.msra.mxu0 %v135
    %160 = vmatprep.subr.mxu0 0.0
    %161 = vmatpush1.msra.mxu0 %v136
    %162 = vmatprep.subr.mxu0 0.0
    %163 = vmatpush1.msra.mxu0 %v137
    %164 = vmatprep.subr.mxu0 0.0
    %165 = vmatpush1.msra.mxu0 %v138
    %166 = vmatprep.subr.mxu0 0.0
    %167 = vmatpush1.msra.mxu0 %v139
    %168 = vmatprep.subr.mxu0 0.0
    %169 = vmatpush1.msra.mxu0 %v140
    %170 = vmatprep.subr.mxu0 0.0
    %171 = vmatpush1.msra.mxu0 %v141
    %172 = vmatprep.subr.mxu0 0.0
    %173 = vmatpush1.msra.mxu0 %v142
    %174 = vmatprep.subr.mxu0 0.0
    %175 = vmatpush1.msra.mxu0 %v143
    %176 = vmatprep.subr.mxu0 0.0
    %177 = vmatpush1.msra.mxu0 %v144
    %178 = vmatprep.subr.mxu0 0.0
    %179 = vmatpush1.msra.mxu0 %v145
    %180 = vmatprep.subr.mxu0 0.0
    %181 = vmatpush1.msra.mxu0 %v146
    %182 = vmatprep.subr.mxu0 0.0
    %183 = vmatpush1.msra.mxu0 %v147
    %184 = vmatprep.subr.mxu0 0.0
    %185 = vmatpush1.msra.mxu0 %v148
    %186 = vmatprep.subr.mxu0 0.0
    %187 = vmatpush1.msra.mxu0 %v149
    %188 = vmatprep.subr.mxu0 0.0
    %189 = vmatpush1.msra.mxu0 %v150
    %190 = vmatprep.subr.mxu0 0.0
    %191 = vmatpush1.msra.mxu0 0.0
    %192 = vmatprep.subr.mxu0 0.0
    %193 = vmatpush1.msra.mxu0 0.0
    %194 = vmatprep.subr.mxu0 0.0
    %195 = vmatpush1.msra.mxu0 0.0
    %196 = vmatprep.subr.mxu0 0.0
    %197 = vmatpush1.msra.mxu0 0.0
    %198 = vmatprep.subr.mxu0 0.0
    %199 = vmatpush1.msra.mxu0 0.0
    %200 = vmatprep.subr.mxu0 0.0
    %201 = vmatpush1.msra.mxu0 0.0
    %202 = vmatprep.subr.mxu0 0.0
    %203 = vmatpush1.msra.mxu0 0.0
    %204 = vmatprep.subr.mxu0 0.0
    %205 = vmatpush1.msra.mxu0 0.0
    %206 = vmatprep.subr.mxu0 0.0
    %207 = vmatpush1.msra.mxu0 0.0
    %208 = vmatprep.subr.mxu0 0.0
    %209 = vmatpush1.msra.mxu0 0.0
    %210 = vmatprep.subr.mxu0 0.0
    %211 = vmatpush1.msra.mxu0 0.0
    %212 = vmatprep.subr.mxu0 0.0
    %213 = vmatpush1.msra.mxu0 0.0
    %214 = vmatprep.subr.mxu0 0.0
    %215 = vmatpush1.msra.mxu0 0.0
    %216 = vmatprep.subr.mxu0 0.0
    %217 = vmatpush1.msra.mxu0 0.0
    %218 = vmatprep.subr.mxu0 0.0
    %219 = vmatpush1.msra.mxu0 0.0
    %220 = vmatprep.subr.mxu0 0.0
    %221 = vmatpush1.msra.mxu0 0.0
    %222 = vmatprep.mubr.f32.mxu0 0.0
    %223 = vmatmul.mubr.f32.gmra.mrb[0].mxu0 %v134
    %v224 = vpop.f32.mrb[0].mxu0
    %v225 = vadd.f32 %v156, %v224
    %v226 = vpop.f32.mrb[0].mxu0
    %227 = vdwg.mxu0
    %v228 = vmax.f32 %v225, 0.0
    %v229 = vld [vmem:[%s5] sm:$0xff]
    %v230 = vld [vmem:[%s5 + $0x8] sm:$0xff]
    %v231 = vld [vmem:[%s5 + $0x10] sm:$0xff]
    %v232 = vld [vmem:[%s5 + $0x18] sm:$0xff]
    %v233 = vld [vmem:[%s5 + $0x20] sm:$0xff]
    %v234 = vld [vmem:[%s5 + $0x28] sm:$0xff]
    %v235 = vld [vmem:[%s5 + $0x30] sm:$0xff]
    %v236 = vld [vmem:[%s5 + $0x38] sm:$0xff]
    %v237 = vld [vmem:[%s5 + $0x40] sm:$0xff]
    %v238 = vld [vmem:[%s5 + $0x48] sm:$0xff]
    %v239 = vld [vmem:[%s5 + $0x50] sm:$0xff]
    %v240 = vld [vmem:[%s5 + $0x58] sm:$0xff]
    %v241 = vld [vmem:[%s5 + $0x60] sm:$0xff]
    %v242 = vld [vmem:[%s5 + $0x68] sm:$0xff]
    %v243 = vld [vmem:[%s5 + $0x70] sm:$0xff]
    %v244 = vld [vmem:[%s5 + $0x78] sm:$0xff]
    %v245 = vld [vmem:[%s6] sm:$0xff]
    %v246 = vld [vmem:[%s6 + $0x8] sm:$0xff]
    %248 = vset.pattern.permute.xlu0 0
    %249 = vperm.xlu0 %248, %v245
    %v250 = vpop.permute.xlu0 %249
    %253 = vset.pattern.permute.xlu0 0
    %254 = vperm.xlu0 %253, %v246
    %v255 = vpop.permute.xlu0 %254
    %257 = vxpose.xlu0.b32.start [1/16] %v229, 128
    %258 = vxpose.xlu0.b32.cont [2/16] %v230, 128
    %259 = vxpose.xlu0.b32.cont [3/16] %v231, 128
    %260 = vxpose.xlu0.b32.cont [4/16] %v232, 128
    %261 = vxpose.xlu0.b32.cont [5/16] %v233, 128
    %262 = vxpose.xlu0.b32.cont [6/16] %v234, 128
    %263 = vxpose.xlu0.b32.cont [7/16] %v235, 128
    %264 = vxpose.xlu0.b32.cont [8/16] %v236, 128
    %265 = vxpose.xlu0.b32.cont [9/16] %v237, 128
    %266 = vxpose.xlu0.b32.cont [10/16] %v238, 128
    %267 = vxpose.xlu0.b32.cont [11/16] %v239, 128
    %268 = vxpose.xlu0.b32.cont [12/16] %v240, 128
    %269 = vxpose.xlu0.b32.cont [13/16] %v241, 128
    %270 = vxpose.xlu0.b32.cont [14/16] %v242, 128
    %271 = vxpose.xlu0.b32.cont [15/16] %v243, 128
    %272 = vxpose.xlu0.b32.end [16/16] %v244, 128
    %v273 = vpop.trf.xlu0
    %v274 = vpop.trf.xlu0
    %v275 = vpop.trf.xlu0
    %v276 = vpop.trf.xlu0
    %v277 = vpop.trf.xlu0
    %v278 = vpop.trf.xlu0
    %v279 = vpop.trf.xlu0
    %v280 = vpop.trf.xlu0
    %v281 = vpop.trf.xlu0
    %v282 = vpop.trf.xlu0
    %v283 = vpop.trf.xlu0
    %v284 = vpop.trf.xlu0
    %v285 = vpop.trf.xlu0
    %v286 = vpop.trf.xlu0
    %v287 = vpop.trf.xlu0
    %v288 = vpop.trf.xlu0
    %289 = vmatprep.subr.mxu0 0.0
    %290 = vmatpush1.xpose.msra.mxu0 %v228
    %291 = vmatprep.subr.mxu0 0.0
    %292 = vmatpush1.xpose.msra.mxu0 0.0
    %293 = vmatprep.subr.mxu0 0.0
    %294 = vmatpush1.xpose.msra.mxu0 0.0
    %295 = vmatprep.subr.mxu0 0.0
    %296 = vmatpush1.xpose.msra.mxu0 0.0
    %297 = vmatprep.subr.mxu0 0.0
    %298 = vmatpush1.xpose.msra.mxu0 0.0
    %299 = vmatprep.subr.mxu0 0.0
    %300 = vmatpush1.xpose.msra.mxu0 0.0
    %301 = vmatprep.subr.mxu0 0.0
    %302 = vmatpush1.xpose.msra.mxu0 0.0
    %303 = vmatprep.subr.mxu0 0.0
    %304 = vmatpush1.xpose.msra.mxu0 0.0
    %305 = vmatprep.subr.mxu0 0.0
    %306 = vmatpush1.xpose.msra.mxu0 0.0
    %307 = vmatprep.subr.mxu0 0.0
    %308 = vmatpush1.xpose.msra.mxu0 0.0
    %309 = vmatprep.subr.mxu0 0.0
    %310 = vmatpush1.xpose.msra.mxu0 0.0
    %311 = vmatprep.subr.mxu0 0.0
    %312 = vmatpush1.xpose.msra.mxu0 0.0
    %313 = vmatprep.subr.mxu0 0.0
    %314 = vmatpush1.xpose.msra.mxu0 0.0
    %315 = vmatprep.subr.mxu0 0.0
    %316 = vmatpush1.xpose.msra.mxu0 0.0
    %317 = vmatprep.subr.mxu0 0.0
    %318 = vmatpush1.xpose.msra.mxu0 0.0
    %319 = vmatprep.subr.mxu0 0.0
    %320 = vmatpush1.xpose.msra.mxu0 0.0
    %321 = vmatprep.subr.mxu0 0.0
    %322 = vmatpush1.xpose.msra.mxu0 0.0
    %323 = vmatprep.subr.mxu0 0.0
    %324 = vmatpush1.xpose.msra.mxu0 0.0
    %325 = vmatprep.subr.mxu0 0.0
    %326 = vmatpush1.xpose.msra.mxu0 0.0
    %327 = vmatprep.subr.mxu0 0.0
    %328 = vmatpush1.xpose.msra.mxu0 0.0
    %329 = vmatprep.subr.mxu0 0.0
    %330 = vmatpush1.xpose.msra.mxu0 0.0
    %331 = vmatprep.subr.mxu0 0.0
    %332 = vmatpush1.xpose.msra.mxu0 0.0
    %333 = vmatprep.subr.mxu0 0.0
    %334 = vmatpush1.xpose.msra.mxu0 0.0
    %335 = vmatprep.subr.mxu0 0.0
    %336 = vmatpush1.xpose.msra.mxu0 0.0
    %337 = vmatprep.subr.mxu0 0.0
    %338 = vmatpush1.xpose.msra.mxu0 0.0
    %339 = vmatprep.subr.mxu0 0.0
    %340 = vmatpush1.xpose.msra.mxu0 0.0
    %341 = vmatprep.subr.mxu0 0.0
    %342 = vmatpush1.xpose.msra.mxu0 0.0
    %343 = vmatprep.subr.mxu0 0.0
    %344 = vmatpush1.xpose.msra.mxu0 0.0
    %345 = vmatprep.subr.mxu0 0.0
    %346 = vmatpush1.xpose.msra.mxu0 0.0
    %347 = vmatprep.subr.mxu0 0.0
    %348 = vmatpush1.xpose.msra.mxu0 0.0
    %349 = vmatprep.subr.mxu0 0.0
    %350 = vmatpush1.xpose.msra.mxu0 0.0
    %351 = vmatprep.subr.mxu0 0.0
    %352 = vmatpush1.xpose.msra.mxu0 0.0
    %353 = vmatprep.mubr.f32.mxu0 0.0
    %354 = vmatmul.mubr.f32.gmra.mrb[0].mxu0 %v273
    %v355 = vpop.f32.mrb[0].mxu0
    %v356 = vadd.f32 %v250, %v355
    %v357 = vpop.f32.mrb[0].mxu0
    %358 = vmatprep.mubr.f32.mxu0 0.0
    %359 = vmatmul.mubr.f32.gmra.mrb[0].mxu0 %v274
    %v360 = vpop.f32.mrb[0].mxu0
    %v361 = vadd.f32 %v255, %v360
    %v362 = vpop.f32.mrb[0].mxu0
    %363 = vdwg.mxu0
    %vm364 = vcmask 64512
    %365 = vst.msk [vmem:[%s7] sm:$0xff] %vm364, %v356
    %366 = vst.msk [vmem:[%s7 + $0x8] sm:$0xff] %vm364, %v361
    // Predicated region
    $region34: #{tpu_custom_call.1} parent=1 // pred_check
      _
    $region35: #{tpu_custom_call.1} parent=1 // pred_check_branch
      %368 = sbr.rel (0) target = $region37
    $region36: #{tpu_custom_call.1} parent=1 // pred_region
      _
    $region37: #{tpu_custom_call.1} parent=1 // pred_fallthru
      _
    // Predicated region
    $region38: #{tpu_custom_call.1} parent=1 // pred_check
      _
    $region39: #{tpu_custom_call.1} parent=1 // pred_check_branch
      %370 = sbr.rel (0) target = $region41
    $region40: #{tpu_custom_call.1} parent=1 // pred_region
      _
    $region41: #{tpu_custom_call.1} parent=1 // pred_fallthru
      _
    %371 = vsyncpa [#allocation3], 1

</llo_original>
